<compile_context>
chip_gen: v5e
topology: v5e:2x2
jax: 0.10.0
libtpu: 0.0.40
codegen_flags: <defaults>
</compile_context>

<pallas_src>
import functools

import jax
import jax.numpy as jnp
from jax.experimental import pallas as pl
from jax.experimental.pallas import tpu as pltpu

_LANE = 128
_SUBLANE = 8
_VMEM_LIMIT = 32 * 1024 * 1024  # safe on v5e/v6e (128 MiB phys) and v7x (64 MiB phys)


def _round_up(x, m):
    return ((x + m - 1) // m) * m


# ---------------------------------------------------------------------------
# Tiled linear kernel: out = [relu](x @ w + b), weight/bias resident in VMEM.
# ---------------------------------------------------------------------------
def _linear_kernel(x_ref, w_ref, b_ref, o_ref, *, relu):
    acc = jnp.dot(x_ref[...], w_ref[...], preferred_element_type=jnp.float32)
    acc = acc + b_ref[...]
    if relu:
        acc = jnp.maximum(acc, 0.0)
    o_ref[...] = acc.astype(o_ref.dtype)


def linear_pallas(x2d, w, b, *, relu=False, block_m=256):
    """x2d: (M, K); w: (K, N) pre-transposed & padded; b: (1, N) -> (M, N)."""
    m, k = x2d.shape
    k_w, n = w.shape
    assert k == k_w and b.shape == (1, n)

    tm = min(block_m, _round_up(m, _SUBLANE))
    m_pad = _round_up(m, tm)
    if m_pad != m:
        x2d = jnp.pad(x2d, ((0, m_pad - m), (0, 0)))

    out = pl.pallas_call(
        functools.partial(_linear_kernel, relu=relu),
        out_shape=jax.ShapeDtypeStruct((m_pad, n), x2d.dtype),
        grid=(m_pad // tm,),
        in_specs=[
            pl.BlockSpec((tm, k), lambda i: (i, 0)),   # activations, tiled over M
            pl.BlockSpec((k, n), lambda i: (0, 0)),    # weight: resident
            pl.BlockSpec((1, n), lambda i: (0, 0)),    # bias: resident
        ],
        out_specs=pl.BlockSpec((tm, n), lambda i: (i, 0)),
        compiler_params=pltpu.CompilerParams(
            dimension_semantics=("parallel",),
            vmem_limit_bytes=_VMEM_LIMIT,
        ),
    )(x2d, w, b)
    return out[:m]


# ---------------------------------------------------------------------------
# Fused FSMN repeat: proj matmul -> depthwise temporal FIR -> affine+bias+ReLU.
# Grid over batch; everything stays in VMEM for one batch element.
# ---------------------------------------------------------------------------
def _fsmn_layer_kernel(x_ref, wp_ref, wl_ref, wr_ref, wa_ref, ba_ref, o_ref,
                       hbuf_ref, *, t, lorder, rorder, lstride, rstride):
    lpad = (lorder - 1) * lstride

    # 1) LinearTransform (no bias): (T, Dl) @ (Dl, Dp) -> (T, Dp)
    h = jnp.dot(x_ref[0], wp_ref[...], preferred_element_type=jnp.float32)

    # 2) Fsmn memory block: zero halo in VMEM scratch, then tap-shifted adds.
    hbuf_ref[...] = jnp.zeros(hbuf_ref.shape, dtype=hbuf_ref.dtype)
    hbuf_ref[pl.ds(lpad, t), :] = h

    acc = h                                             # identity (center) term
    for j in range(lorder):                             # causal (left) taps
        acc = acc + wl_ref[j:j + 1, :] * hbuf_ref[pl.ds(j * lstride, t), :]
    for j in range(rorder):                             # lookahead (right) taps
        s = lpad + (j + 1) * rstride
        acc = acc + wr_ref[j:j + 1, :] * hbuf_ref[pl.ds(s, t), :]

    # 3) AffineTransform + ReLU: (T, Dp) @ (Dp, Dl) + b -> (T, Dl)
    y = jnp.dot(acc.astype(wa_ref.dtype), wa_ref[...],
                preferred_element_type=jnp.float32)
    y = jnp.maximum(y + ba_ref[...], 0.0)
    o_ref[0] = y.astype(o_ref.dtype)


def fsmn_layer_pallas(x, wp, wl, wr, wa, ba, *, lorder, rorder,
                      lstride=1, rstride=1):
    """x: (B, T, Dl_pad). wp: (Dl, Dp), wl: (lorder, Dp), wr: (>=1, Dp),
    wa: (Dp, Dl), ba: (1, Dl). Returns (B, T, Dl_pad)."""
    b, t, dl = x.shape
    dp = wp.shape[1]
    lpad = (lorder - 1) * lstride
    rpad = rorder * rstride
    t_halo = t + lpad + rpad

    kernel = functools.partial(
        _fsmn_layer_kernel, t=t, lorder=lorder, rorder=rorder,
        lstride=lstride, rstride=rstride)

    return pl.pallas_call(
        kernel,
        out_shape=jax.ShapeDtypeStruct((b, t, dl), x.dtype),
        grid=(b,),
        in_specs=[
            pl.BlockSpec((1, t, dl), lambda i: (i, 0, 0)),        # activations
            pl.BlockSpec((dl, dp), lambda i: (0, 0)),             # proj weight
            pl.BlockSpec((wl.shape[0], dp), lambda i: (0, 0)),    # left taps
            pl.BlockSpec((wr.shape[0], dp), lambda i: (0, 0)),    # right taps
            pl.BlockSpec((dp, dl), lambda i: (0, 0)),             # affine weight
            pl.BlockSpec((1, dl), lambda i: (0, 0)),              # affine bias
        ],
        out_specs=pl.BlockSpec((1, t, dl), lambda i: (i, 0, 0)),
        scratch_shapes=[pltpu.VMEM((t_halo, dp), jnp.float32)],
        compiler_params=pltpu.CompilerParams(
            dimension_semantics=("parallel",),
            vmem_limit_bytes=_VMEM_LIMIT,
        ),
    )(x, wp, wl, wr, wa, ba)


# ---------------------------------------------------------------------------
# Full FSMNNet forward (Pallas path) on lane-padded parameters.
# ---------------------------------------------------------------------------
def fsmn_net_forward(x, params, *, num_syn, lorder, rorder,
                     lstride=1, rstride=1, block_m=256):
    b, t, d_in = x.shape
    d_in_p = params["w1"].shape[0]
    if d_in_p != d_in:
        x = jnp.pad(x, ((0, 0), (0, 0), (0, d_in_p - d_in)))

    # linear1 + ReLU
    h = linear_pallas(x.reshape(b * t, d_in_p), params["w1"], params["b1"],
                      relu=True, block_m=block_m)
    dl_p = h.shape[-1]
    h = h.reshape(b, t, dl_p)

    # sequential fused FSMN repeats
    for layer in params["layers"]:
        h = fsmn_layer_pallas(h, layer["wp"], layer["wl"], layer["wr"],
                              layer["wa"], layer["ba"],
                              lorder=lorder, rorder=rorder,
                              lstride=lstride, rstride=rstride)

    # linear2 (logits)
    y = linear_pallas(h.reshape(b * t, dl_p), params["w2"], params["b2"],
                      relu=False, block_m=block_m)
    return y.reshape(b, t, -1)[:, :, :num_syn]


# ---------------------------------------------------------------------------
# Parameter generation (PyTorch layout) + one-time lane-dense packing.
# ---------------------------------------------------------------------------
def make_raw_params(key, *, input_dim, linear_dim, proj_dim, num_syn,
                    lorder, rorder, fsmn_layers):
    def uni(k, shape, scale):
        return jax.random.uniform(k, shape, jnp.float32, -scale, scale)

    keys = jax.random.split(key, 4 + 5 * fsmn_layers)
    raw = {
        "w1": uni(keys[0], (linear_dim, input_dim), 0.1),   # nn.Linear weight (out, in)
        "b1": uni(keys[1], (linear_dim,), 0.1),
        "w2": uni(keys[2], (num_syn, linear_dim), 0.1),
        "b2": uni(keys[3], (num_syn,), 0.1),
        "layers": [],
    }
    for i in range(fsmn_layers):
        kk = keys[4 + 5 * i: 4 + 5 * (i + 1)]
        raw["layers"].append({
            "wp": uni(kk[0], (proj_dim, linear_dim), 0.1),       # LinearTransform (no bias)
            "wl": uni(kk[1], (lorder, proj_dim), 0.2),           # conv_left.weight[:,0,:,0].T
            "wr": uni(kk[2], (max(rorder, 1), proj_dim), 0.2),   # conv_right.weight[:,0,:,0].T
            "wa": uni(kk[3], (linear_dim, proj_dim), 0.1),       # AffineTransform weight
            "ba": uni(kk[4], (linear_dim,), 0.1),
        })
    return raw


def _pad_weight_t(w, k_pad, n_pad):
    """(out=N, in=K) PyTorch layout -> padded, pre-transposed (K_pad, N_pad)."""
    n, k = w.shape
    return jnp.zeros((k_pad, n_pad), w.dtype).at[:k, :n].set(w.T)


def _pad_bias(bvec, n_pad):
    return jnp.zeros((1, n_pad), bvec.dtype).at[0, : bvec.shape[0]].set(bvec)


def _pad_taps(w_taps, d_pad):
    order, d = w_taps.shape
    return jnp.zeros((order, d_pad), w_taps.dtype).at[:, :d].set(w_taps)


def pack_params(raw, *, input_dim, linear_dim, proj_dim, num_syn):
    din_p = _round_up(input_dim, _LANE)
    dl_p = _round_up(linear_dim, _LANE)
    dp_p = _round_up(proj_dim, _LANE)
    ns_p = _round_up(num_syn, _LANE)
    packed = {
        "w1": _pad_weight_t(raw["w1"], din_p, dl_p),
        "b1": _pad_bias(raw["b1"], dl_p),
        "w2": _pad_weight_t(raw["w2"], dl_p, ns_p),
        "b2": _pad_bias(raw["b2"], ns_p),
        "layers": [],
    }
    for lyr in raw["layers"]:
        packed["layers"].append({
            "wp": _pad_weight_t(lyr["wp"], dl_p, dp_p),
            "wl": _pad_taps(lyr["wl"], dp_p),
            "wr": _pad_taps(lyr["wr"], dp_p),
            "wa": _pad_weight_t(lyr["wa"], dp_p, dl_p),
            "ba": _pad_bias(lyr["ba"], dl_p),
        })
    return packed


# ---------------------------------------------------------------------------
# Pure-JAX reference (same math as the PyTorch module).
# ---------------------------------------------------------------------------
def _ref_fir(x, wl, wr, *, lorder, rorder, lstride, rstride):
    _, t, _ = x.shape
    lp = (lorder - 1) * lstride
    rp = rorder * rstride
    xp = jnp.pad(x, ((0, 0), (lp, rp), (0, 0)))
    out = x
    for j in range(lorder):
        out = out + wl[j] * xp[:, j * lstride: j * lstride + t, :]
    for j in range(rorder):
        s = lp + (j + 1) * rstride
        out = out + wr[j] * xp[:, s: s + t, :]
    return out


def fsmn_net_reference(x, raw, *, lorder, rorder, lstride=1, rstride=1):
    hp = jax.lax.Precision.HIGHEST
    h = jnp.maximum(
        jnp.einsum("btk,nk->btn", x, raw["w1"], precision=hp) + raw["b1"], 0.0)
    for lyr in raw["layers"]:
        p = jnp.einsum("btk,nk->btn", h, lyr["wp"], precision=hp)
        m = _ref_fir(p, lyr["wl"], lyr["wr"], lorder=lorder, rorder=rorder,
                     lstride=lstride, rstride=rstride)
        h = jnp.maximum(
            jnp.einsum("btk,nk->btn", m, lyr["wa"], precision=hp) + lyr["ba"], 0.0)
    return jnp.einsum("btk,nk->btn", h, raw["w2"], precision=hp) + raw["b2"]


if __name__ == "__main__":
    # Small config consistent with FSMNNet (real defaults: input_dim=200,
    # linear_dim=proj_dim=128, lorder=10, rorder=1, num_syn=5, 4 layers),
    # scaled down for a quick smoke test.
    B, T = 2, 16
    INPUT_DIM, LINEAR_DIM, PROJ_DIM = 40, 32, 16
    LORDER, RORDER, NUM_SYN, FSMN_LAYERS = 4, 1, 5, 2

    key = jax.random.PRNGKey(0)
    k_x, k_p = jax.random.split(key)
    x = jax.random.normal(k_x, (B, T, INPUT_DIM), dtype=jnp.float32)

    raw = make_raw_params(
        k_p, input_dim=INPUT_DIM, linear_dim=LINEAR_DIM, proj_dim=PROJ_DIM,
        num_syn=NUM_SYN, lorder=LORDER, rorder=RORDER, fsmn_layers=FSMN_LAYERS)
    params = pack_params(
        raw, input_dim=INPUT_DIM, linear_dim=LINEAR_DIM, proj_dim=PROJ_DIM,
        num_syn=NUM_SYN)

    # block_m=16 -> 2 M-tiles at this small size, exercising the pipelined path.
    out = fsmn_net_forward(x, params, num_syn=NUM_SYN, lorder=LORDER,
                           rorder=RORDER, block_m=16)
    out = jax.block_until_ready(out)

    ref = fsmn_net_reference(x, raw, lorder=LORDER, rorder=RORDER)
    assert out.shape == (B, T, NUM_SYN), out.shape
    assert jnp.allclose(out, ref, atol=1e-3, rtol=1e-3), \
        float(jnp.max(jnp.abs(out - ref)))

    print("KERNEL_OK")
</pallas_src>

<mosaic_0001>
module attributes {stable_mosaic.version = 11 : i64} {
  func.func @_linear_kernel(%arg0: i32, %arg1: memref<16x128xf32, #tpu.memory_space<vmem>>, %arg2: memref<128x128xf32, #tpu.memory_space<vmem>>, %arg3: memref<1x128xf32, #tpu.memory_space<vmem>>, %arg4: memref<16x128xf32, #tpu.memory_space<vmem>>) attributes {dimension_semantics = [#tpu.dimension_semantics<parallel>], iteration_bounds = array<i64: 2>, scalar_prefetch = 0 : i64, scratch_operands = 0 : i64, tpu.core_type = #tpu.core_type<tc>, window_params = [{transform_indices = @transform_0, window_bounds = array<i64: 16, 128>}, {pipeline_mode = #tpu.pipeline_mode<synchronous>, transform_indices = @transform_1, window_bounds = array<i64: 128, 128>}, {pipeline_mode = #tpu.pipeline_mode<synchronous>, transform_indices = @transform_2, window_bounds = array<i64: 1, 128>}, {transform_indices = @transform_3, window_bounds = array<i64: 16, 128>}]} {
    %c0 = arith.constant 0 : index
    %c0_0 = arith.constant 0 : index
    %0 = vector.load %arg1[%c0, %c0_0] : memref<16x128xf32, #tpu.memory_space<vmem>>, vector<16x128xf32>
    %c0_1 = arith.constant 0 : index
    %c0_2 = arith.constant 0 : index
    %1 = vector.load %arg2[%c0_1, %c0_2] : memref<128x128xf32, #tpu.memory_space<vmem>>, vector<128x128xf32>
    %cst = arith.constant dense<0.000000e+00> : vector<16x128xf32>
    %2 = tpu.matmul %0, %1, %cst {dimension_numbers = #tpu.dot_dimension_numbers<[1], [0], [0], [1], [0, 0, 1, 1], [], []>} : vector<16x128xf32>, vector<128x128xf32>, vector<16x128xf32> -> vector<16x128xf32>
    %c0_3 = arith.constant 0 : index
    %c0_4 = arith.constant 0 : index
    %3 = vector.load %arg3[%c0_3, %c0_4] : memref<1x128xf32, #tpu.memory_space<vmem>>, vector<1x128xf32>
    %4 = vector.broadcast %3 : vector<1x128xf32> to vector<16x128xf32>
    %5 = arith.addf %2, %4 : vector<16x128xf32>
    %cst_5 = arith.constant 0.000000e+00 : f32
    %6 = vector.broadcast %cst_5 : f32 to vector<16x128xf32>
    %7 = arith.maximumf %5, %6 : vector<16x128xf32>
    %c0_6 = arith.constant 0 : index
    %c0_7 = arith.constant 0 : index
    %8 = vector.load %arg4[%c0_6, %c0_7] : memref<16x128xf32, #tpu.memory_space<vmem>>, vector<16x128xf32>
    tpu.vector_store %arg4[%c0_6, %c0_7], %7 {strides = array<i32>} : memref<16x128xf32, #tpu.memory_space<vmem>>, vector<16x128xf32>,
    return
  }
  func.func @transform_0(%arg0: i32) -> (i32, i32) {
    %c0_i32 = arith.constant 0 : i32
    %c0_i32_0 = arith.constant 0 : i32
    return %arg0, %c0_i32 : i32, i32
  }
  func.func @transform_1(%arg0: i32) -> (i32, i32) {
    %c0_i32 = arith.constant 0 : i32
    %c0_i32_0 = arith.constant 0 : i32
    %c0_i32_1 = arith.constant 0 : i32
    return %c0_i32, %c0_i32_0 : i32, i32
  }
  func.func @transform_2(%arg0: i32) -> (i32, i32) {
    %c0_i32 = arith.constant 0 : i32
    %c0_i32_0 = arith.constant 0 : i32
    %c0_i32_1 = arith.constant 0 : i32
    return %c0_i32, %c0_i32_0 : i32, i32
  }
  func.func @transform_3(%arg0: i32) -> (i32, i32) {
    %c0_i32 = arith.constant 0 : i32
    %c0_i32_0 = arith.constant 0 : i32
    return %arg0, %c0_i32 : i32, i32
  }
}

</mosaic_0001>

<llo_original>
// kernel: tpu_custom_call.1
$region0: #{tpu_custom_call.1}
  #allocation0 [shape = 'u32[]', space=smem, size = 0x4, offset = 0x4, fixed_abs, tag = 'smem constant byte address 0x4 - core index']
  #allocation1 [shape = 'u32[72,128]{1,0:T(1,128)}', space=vmem, size = 0x9000, scoped, tag = 'internal scratch']
  %s0 = inlined_call_operand.hbm [shape: f32[32,128], index: 0, kind: input, shape index: {}]
  %s1 = inlined_call_operand.hbm [shape: f32[128,128], index: 1, kind: input, shape index: {}]
  %s2 = inlined_call_operand.vmem [shape: f32[1,128], index: 2, kind: input, shape index: {}]
  %s3 = inlined_call_operand.hbm [shape: f32[32,128], index: 3, kind: output, shape index: {}]
  %s4 = sld [smem:[#allocation0]]
  $region53: #{tpu_custom_call.1} parent=0
    _
  %s6 = ssub.s32 1, %s4
  %s7 = scalar_select 0, %s6, %s4
  $region1: #{tpu_custom_call.1} parent=0
    #allocation2 [shape = 'u8[16384]{0}', space=vmem, size = 0x4000, scoped, tag = 'input window, operand 0']
    #allocation3 [shape = 's32[2]{0}', space=sflag, size = 0x8, scoped, tag = 'scoped memory for tpu_custom_call.1']
    #allocation4 [shape = 's32[2]{0}', space=sflag, size = 0x8, scoped, tag = 'scoped memory for tpu_custom_call.1']
    #allocation5 [shape = 'u8[65536]{0}', space=vmem, size = 0x10000, scoped, tag = 'input window, operand 1, single buffered']
    #allocation6 [shape = 's32[1]{0}', space=sflag, size = 0x4, scoped, tag = 'scoped memory for tpu_custom_call.1']
    #allocation7 [shape = 'u8[16384]{0}', space=vmem, size = 0x4000, scoped, tag = 'output window, operand 0']
    %8 = vsyncpa [#allocation3], 0
    %s9 = scalar_lea.sflag [#allocation3], 1
    %10 = vsyncpa %s9, 0
    %11 = vsyncpa [#allocation6], 0
    %12 = vsyncpa [#allocation4], 0
    %s13 = scalar_lea.sflag [#allocation4], 1
    %14 = vsyncpa %s13, 0
    loop: start=0, step=1, limit=4
    $region2: #{tpu_custom_call.1} parent=1 // loop_pre_header
      _
    $region3: #{tpu_custom_call.1} parent=1 // loop_header
      %s16 = sphi 0, %s20
      %p17 = scmp.ge.s32.totalorder %s16, 4
      %s26 = sphi 0, %s28
      %s29 = sphi 0, %s26
      %s30 = sphi 0, %s29
      %s46 = sphi 0, %s30
      %s50 = sphi 0, %s50
      %s52 = sphi 0, %s50
      %s53 = sphi 0, %s52
      %s67 = sphi 0, %s53
      %s71 = sphi 0, %s71
      %s73 = sphi 0, %s71
      %s74 = sphi 0, %s73
      %s88 = sphi 0, %s74
      %s94 = sphi 0, %s96
      %s97 = sphi 0, %s94
      %s98 = sphi 0, %s97
      %s114 = sphi 0, %s98
    $region4: #{tpu_custom_call.1} parent=1 // loop_header_branch
      %19 = sbr.rel (%p17) target = $region8
    $region5: #{tpu_custom_call.1} parent=1 // loop_body
      %s21 = ssub.s32 %s16, 1
      %s22 = ssub.s32 %s16, 2
      %s23 = sadd.s32 %s16, 1
      %s24 = ssub.s32 %s16, %s23
      %p25 = scmp.eq.s32.totalorder %s24, 0
      %s27 = sadd.s32 %s26, 1
      %s28 = scalar_select %p25, %s26, %s27
      %p31 = pneg %p25
      %p32 = scmp.eq.s32.totalorder %s16, 1
      %p33 = por %p31, %p32
      %p34 = scmp.ne.s32.totalorder %s26, %s29
      %p35 = scmp.eq.s32.totalorder %s16, 0
      %p36 = por %p34, %p35
      %p37 = scmp.ne.s32.totalorder %s26, %s29
      %p38 = scmp.eq.s32.totalorder %s21, 1
      %p39 = por %p37, %p38
      %p40 = scmp.ne.s32.totalorder %s29, %s30
      %p41 = scmp.eq.s32.totalorder %s21, 0
      %p42 = por %p40, %p41
      %p43 = scmp.ne.s32.totalorder %s29, %s30
      %p44 = scmp.eq.s32.totalorder %s22, 1
      %p45 = por %p43, %p44
      %p47 = scmp.ne.s32.totalorder %s30, %s46
      %p48 = scmp.eq.s32.totalorder %s22, 0
      %p49 = por %p47, %p48
      %s51 = sadd.s32 %s50, 1
      %p54 = scmp.eq.s32.totalorder %s16, 1
      %p55 = scmp.ne.s32.totalorder %s50, %s52
      %p56 = scmp.eq.s32.totalorder %s16, 0
      %p57 = por %p55, %p56
      %p58 = scmp.ne.s32.totalorder %s50, %s52
      %p59 = scmp.eq.s32.totalorder %s21, 1
      %p60 = por %p58, %p59
      %p61 = scmp.ne.s32.totalorder %s52, %s53
      %p62 = scmp.eq.s32.totalorder %s21, 0
      %p63 = por %p61, %p62
      %p64 = scmp.ne.s32.totalorder %s52, %s53
      %p65 = scmp.eq.s32.totalorder %s22, 1
      %p66 = por %p64, %p65
      %p68 = scmp.ne.s32.totalorder %s53, %s67
      %p69 = scmp.eq.s32.totalorder %s22, 0
      %p70 = por %p68, %p69
      %s72 = sadd.s32 %s71, 1
      %p75 = scmp.eq.s32.totalorder %s16, 1
      %p76 = scmp.ne.s32.totalorder %s71, %s73
      %p77 = scmp.eq.s32.totalorder %s16, 0
      %p78 = por %p76, %p77
      %p79 = scmp.ne.s32.totalorder %s71, %s73
      %p80 = scmp.eq.s32.totalorder %s21, 1
      %p81 = por %p79, %p80
      %p82 = scmp.ne.s32.totalorder %s73, %s74
      %p83 = scmp.eq.s32.totalorder %s21, 0
      %p84 = por %p82, %p83
      %p85 = scmp.ne.s32.totalorder %s73, %s74
      %p86 = scmp.eq.s32.totalorder %s22, 1
      %p87 = por %p85, %p86
      %p89 = scmp.ne.s32.totalorder %s74, %s88
      %p90 = scmp.eq.s32.totalorder %s22, 0
      %p91 = por %p89, %p90
      %s92 = ssub.s32 %s16, %s23
      %p93 = scmp.eq.s32.totalorder %s92, 0
      %s95 = sadd.s32 %s94, 1
      %s96 = scalar_select %p93, %s94, %s95
      %p99 = pneg %p93
      %p100 = scmp.eq.s32.totalorder %s16, 1
      %p101 = por %p99, %p100
      %p102 = scmp.ne.s32.totalorder %s94, %s97
      %p103 = scmp.eq.s32.totalorder %s16, 0
      %p104 = por %p102, %p103
      %p105 = scmp.ne.s32.totalorder %s94, %s97
      %p106 = scmp.eq.s32.totalorder %s21, 1
      %p107 = por %p105, %p106
      %p108 = scmp.ne.s32.totalorder %s97, %s98
      %p109 = scmp.eq.s32.totalorder %s21, 0
      %p110 = por %p108, %p109
      %p111 = scmp.ne.s32.totalorder %s97, %s98
      %p112 = scmp.eq.s32.totalorder %s22, 1
      %p113 = por %p111, %p112
      %p115 = scmp.ne.s32.totalorder %s98, %s114
      %p116 = scmp.eq.s32.totalorder %s22, 0
      %p117 = por %p115, %p116
      %p118 = scmp.le.s32.totalorder 1, %s16
      %p119 = scmp.lt.s32.totalorder %s16, 3
      %p120 = pnand %p118, %p119
      %p121 = pneg %p120
      // Predicated region
      $region9: #{tpu_custom_call.1} parent=5 // pred_check
        _
      $region10: #{tpu_custom_call.1} parent=5 // pred_check_branch
        %123 = sbr.rel (%p120) target = $region12
      $region11: #{tpu_custom_call.1} parent=5 // pred_region
        %s124 = ssub.s32 %s16, 1
        // Predicated region
        $region13: #{tpu_custom_call.1} parent=11 // pred_check
          %p125 = pneg %p63
        $region14: #{tpu_custom_call.1} parent=11 // pred_check_branch
          %127 = sbr.rel (%p125) target = $region16
        $region15: #{tpu_custom_call.1} parent=11 // pred_region
          %129 = vsyncadd [#allocation6], 0
          %s130 = sshll.u32 %s1, 4
          %s131 = int_to_ptr.hbm [resolvable:$true] %s130
          %s132 = sshll.u32 [#allocation5], 4
          %s133 = int_to_ptr.vmem [resolvable:$true] %s132
          %138 = dma.hbm_to_vmem [thread:$0]  %s131, 2048, %s133, [#allocation6], 128, 128, 8
        $region16: #{tpu_custom_call.1} parent=11 // pred_fallthru
          _
        // Predicated region
        $region17: #{tpu_custom_call.1} parent=11 // pred_check
          %p139 = pneg %p84
        $region18: #{tpu_custom_call.1} parent=11 // pred_check_branch
          %141 = sbr.rel (%p139) target = $region20
        $region19: #{tpu_custom_call.1} parent=11 // pred_region
          _
        $region20: #{tpu_custom_call.1} parent=11 // pred_fallthru
          _
      $region12: #{tpu_custom_call.1} parent=5 // pred_fallthru
        _
      %p142 = scmp.lt.s32.totalorder %s16, 2
      // Predicated region
      $region21: #{tpu_custom_call.1} parent=5 // pred_check
        %p143 = pneg %p142
      $region22: #{tpu_custom_call.1} parent=5 // pred_check_branch
        %145 = sbr.rel (%p143) target = $region24
      $region23: #{tpu_custom_call.1} parent=5 // pred_region
        // Predicated region
        $region25: #{tpu_custom_call.1} parent=23 // pred_check
          %p146 = pneg %p36
        $region26: #{tpu_custom_call.1} parent=23 // pred_check_branch
          %148 = sbr.rel (%p146) target = $region28
        $region27: #{tpu_custom_call.1} parent=23 // pred_region
          %s149 = sand.u32 %s26, 1
          %s150 = scalar_lea.sflag [#allocation3], %s149
          %s151 = sand.u32 %s26, 1
          %s152 = smul.addr %s151, 16
          %s153 = scalar_lea.vmem [#allocation2], %s152
          %s154 = smul.u32 2, %s16
          %156 = vsyncadd %s150, 0
          %s157 = smul.addr %s154, 8
          %s158 = scalar_lea.hbm %s0, %s157
          %s159 = sshll.u32 %s158, 4
          %s160 = int_to_ptr.hbm [resolvable:$true] %s159
          %s161 = sshll.u32 %s153, 4
          %s162 = int_to_ptr.vmem [resolvable:$true] %s161
          %167 = dma.hbm_to_vmem [thread:$0]  %s160, 256, %s162, %s150, 128, 128, 8
        $region28: #{tpu_custom_call.1} parent=23 // pred_fallthru
          _
      $region24: #{tpu_custom_call.1} parent=5 // pred_fallthru
        _
      %p168 = scmp.le.s32.totalorder 1, %s16
      %p169 = scmp.lt.s32.totalorder %s16, 3
      %p170 = pnand %p168, %p169
      %p171 = pneg %p170
      // Predicated region
      $region29: #{tpu_custom_call.1} parent=5 // pred_check
        _
      $region30: #{tpu_custom_call.1} parent=5 // pred_check_branch
        %173 = sbr.rel (%p170) target = $region32
      $region31: #{tpu_custom_call.1} parent=5 // pred_region
        %s174 = ssub.s32 %s16, 1
        %s175 = sand.u32 %s29, 1
        %s176 = scalar_lea.sflag [#allocation3], %s175
        %s177 = sand.u32 %s29, 1
        %s178 = smul.addr %s177, 16
        %s179 = scalar_lea.vmem [#allocation2], %s178
        // Predicated region
        $region33: #{tpu_custom_call.1} parent=31 // pred_check
          %p180 = pneg %p42
        $region34: #{tpu_custom_call.1} parent=31 // pred_check_branch
          %182 = sbr.rel (%p180) target = $region36
        $region35: #{tpu_custom_call.1} parent=31 // pred_region
          %184 = dma.done %s176, 256
        $region36: #{tpu_custom_call.1} parent=31 // pred_fallthru
          _
        // Predicated region
        $region37: #{tpu_custom_call.1} parent=31 // pred_check
          %p185 = pneg %p63
        $region38: #{tpu_custom_call.1} parent=31 // pred_check_branch
          %187 = sbr.rel (%p185) target = $region40
        $region39: #{tpu_custom_call.1} parent=31 // pred_region
          %189 = dma.done [#allocation6], 2048
        $region40: #{tpu_custom_call.1} parent=31 // pred_fallthru
          _
        %s190 = sand.u32 %s29, 1
        %s191 = scalar_lea.sflag [#allocation3], %s190
        %s192 = sand.u32 %s29, 1
        %s193 = smul.addr %s192, 16
        %s194 = scalar_lea.vmem [#allocation2], %s193
        %p195 = pneg %p42
        %p196 = pneg %p39
        %p197 = pneg %p63
        %p198 = pneg %p60
        %p199 = pneg %p84
        %p200 = pneg %p81
        %p201 = pneg %p110
        %p202 = pneg %p107
        %s203 = sand.u32 %s97, 1
        %s204 = scalar_lea.sflag [#allocation4], %s203
        %s205 = sand.u32 %s97, 1
        %s206 = smul.addr %s205, 16
        %s207 = scalar_lea.vmem [#allocation7], %s206
        %s208 = smul.u32 2, %s21
        %s209 = smul.u32 2, %s21
        %v210 = vld [vmem:[%s179] sm:$0xff]
        %v211 = vld [vmem:[%s179 + $0x8] sm:$0xff]
        %v212 = vld [vmem:[#allocation5] sm:$0xff]
        %v213 = vld [vmem:[#allocation5 + $0x8] sm:$0xff]
        %v214 = vld [vmem:[#allocation5 + $0x10] sm:$0xff]
        %v215 = vld [vmem:[#allocation5 + $0x18] sm:$0xff]
        %v216 = vld [vmem:[#allocation5 + $0x20] sm:$0xff]
        %v217 = vld [vmem:[#allocation5 + $0x28] sm:$0xff]
        %v218 = vld [vmem:[#allocation5 + $0x30] sm:$0xff]
        %v219 = vld [vmem:[#allocation5 + $0x38] sm:$0xff]
        %v220 = vld [vmem:[#allocation5 + $0x40] sm:$0xff]
        %v221 = vld [vmem:[#allocation5 + $0x48] sm:$0xff]
        %v222 = vld [vmem:[#allocation5 + $0x50] sm:$0xff]
        %v223 = vld [vmem:[#allocation5 + $0x58] sm:$0xff]
        %v224 = vld [vmem:[#allocation5 + $0x60] sm:$0xff]
        %v225 = vld [vmem:[#allocation5 + $0x68] sm:$0xff]
        %v226 = vld [vmem:[#allocation5 + $0x70] sm:$0xff]
        %v227 = vld [vmem:[#allocation5 + $0x78] sm:$0xff]
        %v228 = vld [vmem:[%s2] sm:$0x1]
        %v230 = vperm.slane %v228, 0
        %232 = vmatpush.msra.mxu0 %v227
        %233 = vmatpush.msra.mxu0 %v226
        %234 = vmatpush.msra.mxu0 %v225
        %235 = vmatpush.msra.mxu0 %v224
        %236 = vmatpush.msra.mxu0 %v223
        %237 = vmatpush.msra.mxu0 %v222
        %238 = vmatpush.msra.mxu0 %v221
        %239 = vmatpush.msra.mxu0 %v220
        %240 = vmatpush.msra.mxu0 %v219
        %241 = vmatpush.msra.mxu0 %v218
        %242 = vmatpush.msra.mxu0 %v217
        %243 = vmatpush.msra.mxu0 %v216
        %244 = vmatpush.msra.mxu0 %v215
        %245 = vmatpush.msra.mxu0 %v214
        %246 = vmatpush.msra.mxu0 %v213
        %247 = vmatpush.msra.mxu0 %v212
        %248 = vmatmul.f32.gmra.mxu0 %v210
        %v249 = vpop.f32.mrf.mxu0
        %v250 = vadd.f32 %v230, %v249
        %251 = vmatmul.f32.gmra.mxu0 %v211
        %v252 = vpop.f32.mrf.mxu0
        %v253 = vadd.f32 %v230, %v252
        %254 = vdwg.mxu0
        %v255 = vmax.f32 %v250, 0.0
        %v256 = vmax.f32 %v253, 0.0
        %257 = vst [vmem:[%s207] sm:$0xff] %v255
        %258 = vst [vmem:[%s207 + $0x8] sm:$0xff] %v256
        %s259 = sand.u32 %s97, 1
        %s260 = scalar_lea.sflag [#allocation4], %s259
        %s261 = sand.u32 %s97, 1
        %s262 = smul.addr %s261, 16
        %s263 = scalar_lea.vmem [#allocation7], %s262
        // Predicated region
        $region41: #{tpu_custom_call.1} parent=31 // pred_check
          %p264 = pneg %p107
        $region42: #{tpu_custom_call.1} parent=31 // pred_check_branch
          %266 = sbr.rel (%p264) target = $region44
        $region43: #{tpu_custom_call.1} parent=31 // pred_region
          %s267 = smul.u32 2, %s21
          %269 = vsyncadd %s260, 0
          %s270 = smul.addr %s267, 8
          %s271 = scalar_lea.hbm %s3, %s270
          %s272 = sshll.u32 %s263, 4
          %s273 = int_to_ptr.vmem [resolvable:$true] %s272
          %s274 = sshll.u32 %s271, 4
          %s275 = int_to_ptr.hbm [resolvable:$true] %s274
          %280 = dma.vmem_to_hbm [thread:$0]  %s273, 256, %s275, %s260, 128, 128, 8
        $region44: #{tpu_custom_call.1} parent=31 // pred_fallthru
          _
      $region32: #{tpu_custom_call.1} parent=5 // pred_fallthru
        _
      %p281 = scmp.le.s32.totalorder 2, %s16
      // Predicated region
      $region45: #{tpu_custom_call.1} parent=5 // pred_check
        %p282 = pneg %p281
      $region46: #{tpu_custom_call.1} parent=5 // pred_check_branch
        %284 = sbr.rel (%p282) target = $region48
      $region47: #{tpu_custom_call.1} parent=5 // pred_region
        %s285 = ssub.s32 %s16, 2
        // Predicated region
        $region49: #{tpu_custom_call.1} parent=47 // pred_check
          %p286 = pneg %p113
        $region50: #{tpu_custom_call.1} parent=47 // pred_check_branch
          %288 = sbr.rel (%p286) target = $region52
        $region51: #{tpu_custom_call.1} parent=47 // pred_region
          %s289 = sand.u32 %s98, 1
          %s290 = scalar_lea.sflag [#allocation4], %s289
          %s291 = sand.u32 %s98, 1
          %s292 = smul.addr %s291, 16
          %s293 = scalar_lea.vmem [#allocation7], %s292
          %295 = dma.done %s290, 256
        $region52: #{tpu_custom_call.1} parent=47 // pred_fallthru
          _
      $region48: #{tpu_custom_call.1} parent=5 // pred_fallthru
        _
    $region6: #{tpu_custom_call.1} parent=1 // loop_footer
      %s20 = sadd.s32 1, %s16
    $region7: #{tpu_custom_call.1} parent=1 // loop_footer_branch
      %15 = sbr.rel target = $region3
    $region8: #{tpu_custom_call.1} parent=1 // loop_exit
      _
    %296 = vsyncpa [#allocation3], 1
    %s297 = scalar_lea.sflag [#allocation3], 1
    %298 = vsyncpa %s297, 1
    %299 = vsyncpa [#allocation6], 1
    %300 = vsyncpa [#allocation4], 1
    %s301 = scalar_lea.sflag [#allocation4], 1
    %302 = vsyncpa %s301, 1

</llo_original>
